<compile_context>
chip_gen: v7x
topology: tpu7x:2x2x1
jax: 0.10.0
libtpu: 0.0.40
codegen_flags: <defaults>
</compile_context>

<pallas_src>
import functools

import jax
import jax.numpy as jnp
from jax.experimental import pallas as pl
from jax.experimental.pallas import tpu as pltpu

LANE = 128


def _round_up(x, m):
    return ((x + m - 1) // m) * m


# ------------------------------------------------------------- weight packing
def _pack_params(params):
    """Pack all inner-model weights into ONE contiguous lane-dense buffer.

    Layout (rows, 128) float32:
      rows [0    : KP   )  input projection  [Ws; Wa; Wg; w_sig; b1; 0-pad]  (KP = 128)
      rows [KP   : KP+HP)  output projection Wout (zero-padded)              (HP = 128)
      rows [KP+HP: +8   )  b2 in row 0, remaining rows zero
    The input-feature order matches the in-kernel row assembly:
      [state | action | goal | c_noise | 1 | zero-pad].
    All padding is zeros and SiLU(0)=0, so the padding is algebraically exact.
    """
    ws, wa, wg, wsig, b1, wout, b2 = params
    obs, h = ws.shape
    act = wa.shape[0]
    goal = wg.shape[0]
    act_out = wout.shape[1]

    k = obs + act + goal + 2                      # state|action|goal|c_noise|1
    kp = _round_up(k, LANE)
    hp = _round_up(h, LANE)
    ap = _round_up(act_out, LANE)
    # Hidden and output feature dims must pad to the same lane width so the
    # three weight pieces stack on the sublane axis into one buffer.
    assert hp == ap, "packed layout requires padded hidden == padded output dim"

    w_in = jnp.concatenate([ws, wa, wg, wsig, b1], axis=0)          # (K, H)
    w_in = jnp.pad(w_in, ((0, kp - k), (0, hp - h)))                # (KP, HP)
    wout_p = jnp.pad(wout, ((0, hp - h), (0, ap - act_out)))        # (HP, AP)
    b2_p = jnp.pad(b2, ((0, 7), (0, ap - act_out)))                 # (8,  AP)
    w_pack = jnp.concatenate([w_in, wout_p, b2_p], axis=0)          # (KP+HP+8, AP)

    dims = dict(obs=obs, act=act, goal=goal, kp=kp, hp=hp, ap=ap, act_out=act_out)
    return w_pack, dims


# --------------------------------------------------------------- kernel bodies
def _assemble_rows(xin_ref, row0, state, action, c_noise, ones, dims, goal=None):
    """Write one [state | action | goal? | c_noise | 1 | 0-pad] row block into the
    K-padded VMEM scratch via static slices. Goal lanes stay zero when goal=None
    (exact unconditional pass, since W_in's Wg rows then multiply zeros)."""
    obs, act, goal_dim = dims["obs"], dims["act"], dims["goal"]
    b = state.shape[0]
    o_a = obs
    o_g = obs + act
    o_cn = obs + act + goal_dim
    xin_ref[row0:row0 + b, 0:obs] = state
    xin_ref[row0:row0 + b, o_a:o_g] = action
    if goal is not None:
        xin_ref[row0:row0 + b, o_g:o_cn] = goal
    xin_ref[row0:row0 + b, o_cn:o_cn + 1] = c_noise
    xin_ref[row0:row0 + b, o_cn + 1:o_cn + 2] = ones


def _kernel_cond(state_ref, action_ref, goal_ref, sigma_ref, w_ref, out_ref,
                 xin_ref, *, dims):
    """cond_lambda == 1: single conditional pass (PyTorch `if self.cond` branch)."""
    kp, hp = dims["kp"], dims["hp"]
    b = state_ref.shape[0]
    # sigma assumed > 0 (as in the PyTorch module); log(sigma<=0) would be NaN/-inf.
    c_noise = jnp.log(sigma_ref[...]) * 0.25                        # (B, 1)
    ones = jnp.ones((b, 1), jnp.float32)
    xin_ref[...] = jnp.zeros_like(xin_ref)
    _assemble_rows(xin_ref, 0, state_ref[...], action_ref[...], c_noise, ones,
                   dims, goal=goal_ref[...])
    pre = jnp.dot(xin_ref[...], w_ref[0:kp, :],
                  preferred_element_type=jnp.float32)                # (B, HP)
    h = pre * jax.nn.sigmoid(pre)                                    # SiLU (EUP)
    out_ref[...] = (jnp.dot(h, w_ref[kp:kp + hp, :],
                            preferred_element_type=jnp.float32)
                    + w_ref[kp + hp:kp + hp + 1, :])


def _kernel_uncond(state_ref, action_ref, sigma_ref, w_ref, out_ref,
                   xin_ref, *, dims):
    """cond_lambda == 0: pure unconditional pass (goal never passed / DMA'd)."""
    kp, hp = dims["kp"], dims["hp"]
    b = state_ref.shape[0]
    c_noise = jnp.log(sigma_ref[...]) * 0.25
    ones = jnp.ones((b, 1), jnp.float32)
    xin_ref[...] = jnp.zeros_like(xin_ref)
    _assemble_rows(xin_ref, 0, state_ref[...], action_ref[...], c_noise, ones, dims)
    pre = jnp.dot(xin_ref[...], w_ref[0:kp, :],
                  preferred_element_type=jnp.float32)
    h = pre * jax.nn.sigmoid(pre)
    out_ref[...] = (jnp.dot(h, w_ref[kp:kp + hp, :],
                            preferred_element_type=jnp.float32)
                    + w_ref[kp + hp:kp + hp + 1, :])


def _kernel_guided(state_ref, action_ref, goal_ref, sigma_ref, w_ref, out_ref,
                   xin_ref, *, dims, cond_lambda):
    """General CFG: stacked (2B, K) input -> one layer-1 matmul, one SiLU pass;
    combine folded through the shared output projection (exact identity)."""
    kp, hp = dims["kp"], dims["hp"]
    b = state_ref.shape[0]
    c_noise = jnp.log(sigma_ref[...]) * 0.25
    ones = jnp.ones((b, 1), jnp.float32)
    state = state_ref[...]
    action = action_ref[...]
    xin_ref[...] = jnp.zeros_like(xin_ref)
    _assemble_rows(xin_ref, 0, state, action, c_noise, ones, dims)               # uncond rows
    _assemble_rows(xin_ref, b, state, action, c_noise, ones, dims,
                   goal=goal_ref[...])                                           # cond rows
    pre = jnp.dot(xin_ref[...], w_ref[0:kp, :],
                  preferred_element_type=jnp.float32)                # (2B, HP)
    h = pre * jax.nn.sigmoid(pre)                                    # one SiLU pass
    h_u = h[0:b, :]
    h_c = h[b:2 * b, :]
    h_mix = h_u + cond_lambda * (h_c - h_u)                          # exact CFG fold
    out_ref[...] = (jnp.dot(h_mix, w_ref[kp:kp + hp, :],
                            preferred_element_type=jnp.float32)
                    + w_ref[kp + hp:kp + hp + 1, :])


# -------------------------------------------------------------------- wrapper
def _cfg_forward_padded(state, action, goal, sigma, w_pack, dims, cond_lambda):
    """Returns the lane-dense padded output (B, AP); columns [act_out:] are zero."""
    b = state.shape[0]
    ap = dims["ap"]
    lam = float(cond_lambda)

    vmem = pl.BlockSpec(memory_space=pltpu.MemorySpace.VMEM)
    if lam == 1.0:
        kernel = functools.partial(_kernel_cond, dims=dims)
        inputs = (state, action, goal, sigma, w_pack)
        xin_rows = b
    elif lam == 0.0:
        kernel = functools.partial(_kernel_uncond, dims=dims)
        inputs = (state, action, sigma, w_pack)                      # goal never DMA'd
        xin_rows = b
    else:
        kernel = functools.partial(_kernel_guided, dims=dims, cond_lambda=lam)
        inputs = (state, action, goal, sigma, w_pack)
        xin_rows = 2 * b

    return pl.pallas_call(
        kernel,
        out_shape=jax.ShapeDtypeStruct((b, ap), jnp.float32),
        in_specs=[vmem] * len(inputs),
        out_specs=vmem,
        scratch_shapes=[pltpu.VMEM((xin_rows, dims["kp"]), jnp.float32)],
    )(*inputs)


class ClassifierFreeSampleModel:
    """JAX/Pallas port of diffusion_policy ClassifierFreeSampleModel."""

    def __init__(self, params, cond_lambda: float = 2.0):
        self._params = params
        self.cond_lambda = float(cond_lambda)
        self.cond = (self.cond_lambda == 1.0)
        w_pack, dims = _pack_params(params)
        act_dim = dims["act_out"]
        lam = self.cond_lambda

        def _fwd_padded(state, action, goal, sigma):
            return _cfg_forward_padded(state, action, goal, sigma, w_pack, dims, lam)

        # Perf-sensitive consumers (e.g. the sampler loop) should use the padded
        # output directly and defer/fuse the slice themselves.
        self.forward_padded = jax.jit(_fwd_padded)

        def _fwd(state, action, goal, sigma):
            # Slice kept inside the jit so XLA fuses it; the kernel still stores
            # full unmasked 128-lane vregs.
            return _fwd_padded(state, action, goal, sigma)[:, :act_dim]

        self._forward = jax.jit(_fwd)

    def __call__(self, state, action, goal, sigma, **extra_args):
        return self._forward(state, action, goal, sigma)

    def get_params(self):
        return self._params


# ------------------------------------------------------------------ reference
def _reference(state, action, goal, sigma, params, cond_lambda):
    ws, wa, wg, wsig, b1, wout, b2 = params
    hi = jax.lax.Precision.HIGHEST
    c_noise = jnp.log(sigma) * 0.25

    def model(uncond):
        pre = (jnp.dot(state, ws, precision=hi) + jnp.dot(action, wa, precision=hi)
               + c_noise * wsig + b1)
        if not uncond:
            pre = pre + jnp.dot(goal, wg, precision=hi)
        h = pre * jax.nn.sigmoid(pre)
        return jnp.dot(h, wout, precision=hi) + b2

    if cond_lambda == 1.0:
        return model(uncond=False)
    if cond_lambda == 0.0:
        return model(uncond=True)
    out = model(uncond=False)
    out_unc = model(uncond=True)
    return out_unc + cond_lambda * (out - out_unc)


# ----------------------------------------------------------------------- main
if __name__ == "__main__":
    B, OBS, ACT, GOAL, H = 8, 16, 16, 16, 32
    key = jax.random.PRNGKey(0)
    ks = jax.random.split(key, 12)

    # deterministic synthetic inner-model parameters
    params = (
        jax.random.normal(ks[0], (OBS, H), jnp.float32) * 0.1,    # Ws
        jax.random.normal(ks[1], (ACT, H), jnp.float32) * 0.1,    # Wa
        jax.random.normal(ks[2], (GOAL, H), jnp.float32) * 0.1,   # Wg
        jax.random.normal(ks[3], (1, H), jnp.float32) * 0.1,      # w_sig
        jax.random.normal(ks[4], (1, H), jnp.float32) * 0.01,     # b1
        jax.random.normal(ks[5], (H, ACT), jnp.float32) * 0.1,    # Wout
        jax.random.normal(ks[6], (1, ACT), jnp.float32) * 0.01,   # b2
    )

    # deterministic example inputs
    state = jax.random.normal(ks[7], (B, OBS), jnp.float32)
    action = jax.random.normal(ks[8], (B, ACT), jnp.float32)
    goal = jax.random.normal(ks[9], (B, GOAL), jnp.float32)
    sigma = jnp.exp(jax.random.normal(ks[10], (B, 1), jnp.float32))   # > 0

    # exercise all three cond_lambda branches (guided / conditional / unconditional)
    for lam in (2.0, 1.0, 0.0):
        sampler = ClassifierFreeSampleModel(params, cond_lambda=lam)
        out = jax.block_until_ready(sampler(state, action, goal, sigma))
        ref = _reference(state, action, goal, sigma, params, lam)
        assert out.shape == (B, ACT)
        assert jnp.allclose(out, ref, atol=5e-4, rtol=5e-4), f"mismatch for lambda={lam}"

        # padded fast-path output: extra lanes are exactly zero
        out_pad = jax.block_until_ready(sampler.forward_padded(state, action, goal, sigma))
        assert out_pad.shape[1] % 128 == 0
        assert jnp.allclose(out_pad[:, :ACT], ref, atol=5e-4, rtol=5e-4)

    print("KERNEL_OK")
</pallas_src>

<mosaic_0001>
module attributes {stable_mosaic.version = 11 : i64} {
  func.func @_kernel_guided(%arg0: memref<8x16xf32, #tpu.memory_space<vmem>>, %arg1: memref<8x16xf32, #tpu.memory_space<vmem>>, %arg2: memref<8x16xf32, #tpu.memory_space<vmem>>, %arg3: memref<8x1xf32, #tpu.memory_space<vmem>>, %arg4: memref<264x128xf32, #tpu.memory_space<vmem>>, %arg5: memref<8x128xf32, #tpu.memory_space<vmem>>, %arg6: memref<16x128xf32, #tpu.memory_space<vmem>>) attributes {dimension_semantics = [], scalar_prefetch = 0 : i64, scratch_operands = 1 : i64, tpu.core_type = #tpu.core_type<tc>} {
    %c0 = arith.constant 0 : index
    %c0_0 = arith.constant 0 : index
    %0 = vector.load %arg3[%c0, %c0_0] : memref<8x1xf32, #tpu.memory_space<vmem>>, vector<8x1xf32>
    %1 = math.log %0 : vector<8x1xf32>
    %cst = arith.constant 2.500000e-01 : f32
    %2 = vector.broadcast %cst : f32 to vector<8x1xf32>
    %3 = arith.mulf %1, %2 : vector<8x1xf32>
    %cst_1 = arith.constant 1.000000e+00 : f32
    %4 = vector.broadcast %cst_1 : f32 to vector<8x1xf32>
    %c0_2 = arith.constant 0 : index
    %c0_3 = arith.constant 0 : index
    %5 = vector.load %arg0[%c0_2, %c0_3] : memref<8x16xf32, #tpu.memory_space<vmem>>, vector<8x16xf32>
    %c0_4 = arith.constant 0 : index
    %c0_5 = arith.constant 0 : index
    %6 = vector.load %arg1[%c0_4, %c0_5] : memref<8x16xf32, #tpu.memory_space<vmem>>, vector<8x16xf32>
    %cst_6 = arith.constant 0.000000e+00 : f32
    %7 = vector.broadcast %cst_6 : f32 to vector<16x128xf32>
    %c0_7 = arith.constant 0 : index
    %c0_8 = arith.constant 0 : index
    %8 = vector.load %arg6[%c0_7, %c0_8] : memref<16x128xf32, #tpu.memory_space<vmem>>, vector<16x128xf32>
    tpu.vector_store %arg6[%c0_7, %c0_8], %7 {strides = array<i32>} : memref<16x128xf32, #tpu.memory_space<vmem>>, vector<16x128xf32>,
    %c0_9 = arith.constant 0 : index
    %c0_10 = arith.constant 0 : index
    %9 = vector.load %arg6[%c0_9, %c0_10] : memref<16x128xf32, #tpu.memory_space<vmem>>, vector<8x16xf32>
    tpu.vector_store %arg6[%c0_9, %c0_10], %5 {strides = array<i32>} : memref<16x128xf32, #tpu.memory_space<vmem>>, vector<8x16xf32>,
    %c0_11 = arith.constant 0 : index
    %c16 = arith.constant 16 : index
    %10 = vector.load %arg6[%c0_11, %c16] : memref<16x128xf32, #tpu.memory_space<vmem>>, vector<8x16xf32>
    tpu.vector_store %arg6[%c0_11, %c16], %6 {strides = array<i32>} : memref<16x128xf32, #tpu.memory_space<vmem>>, vector<8x16xf32>,
    %c0_12 = arith.constant 0 : index
    %c48 = arith.constant 48 : index
    %11 = vector.load %arg6[%c0_12, %c48] : memref<16x128xf32, #tpu.memory_space<vmem>>, vector<8x1xf32>
    tpu.vector_store %arg6[%c0_12, %c48], %3 {strides = array<i32>} : memref<16x128xf32, #tpu.memory_space<vmem>>, vector<8x1xf32>,
    %c0_13 = arith.constant 0 : index
    %c49 = arith.constant 49 : index
    %12 = vector.load %arg6[%c0_13, %c49] : memref<16x128xf32, #tpu.memory_space<vmem>>, vector<8x1xf32>
    tpu.vector_store %arg6[%c0_13, %c49], %4 {strides = array<i32>} : memref<16x128xf32, #tpu.memory_space<vmem>>, vector<8x1xf32>,
    %c0_14 = arith.constant 0 : index
    %c0_15 = arith.constant 0 : index
    %13 = vector.load %arg2[%c0_14, %c0_15] : memref<8x16xf32, #tpu.memory_space<vmem>>, vector<8x16xf32>
    %c8 = arith.constant 8 : index
    %c0_16 = arith.constant 0 : index
    %14 = vector.load %arg6[%c8, %c0_16] : memref<16x128xf32, #tpu.memory_space<vmem>>, vector<8x16xf32>
    tpu.vector_store %arg6[%c8, %c0_16], %5 {strides = array<i32>} : memref<16x128xf32, #tpu.memory_space<vmem>>, vector<8x16xf32>,
    %c8_17 = arith.constant 8 : index
    %c16_18 = arith.constant 16 : index
    %15 = vector.load %arg6[%c8_17, %c16_18] : memref<16x128xf32, #tpu.memory_space<vmem>>, vector<8x16xf32>
    tpu.vector_store %arg6[%c8_17, %c16_18], %6 {strides = array<i32>} : memref<16x128xf32, #tpu.memory_space<vmem>>, vector<8x16xf32>,
    %c8_19 = arith.constant 8 : index
    %c32 = arith.constant 32 : index
    %16 = vector.load %arg6[%c8_19, %c32] : memref<16x128xf32, #tpu.memory_space<vmem>>, vector<8x16xf32>
    tpu.vector_store %arg6[%c8_19, %c32], %13 {strides = array<i32>} : memref<16x128xf32, #tpu.memory_space<vmem>>, vector<8x16xf32>,
    %c8_20 = arith.constant 8 : index
    %c48_21 = arith.constant 48 : index
    %17 = vector.load %arg6[%c8_20, %c48_21] : memref<16x128xf32, #tpu.memory_space<vmem>>, vector<8x1xf32>
    tpu.vector_store %arg6[%c8_20, %c48_21], %3 {strides = array<i32>} : memref<16x128xf32, #tpu.memory_space<vmem>>, vector<8x1xf32>,
    %c8_22 = arith.constant 8 : index
    %c49_23 = arith.constant 49 : index
    %18 = vector.load %arg6[%c8_22, %c49_23] : memref<16x128xf32, #tpu.memory_space<vmem>>, vector<8x1xf32>
    tpu.vector_store %arg6[%c8_22, %c49_23], %4 {strides = array<i32>} : memref<16x128xf32, #tpu.memory_space<vmem>>, vector<8x1xf32>,
    %c0_24 = arith.constant 0 : index
    %c0_25 = arith.constant 0 : index
    %19 = vector.load %arg6[%c0_24, %c0_25] : memref<16x128xf32, #tpu.memory_space<vmem>>, vector<16x128xf32>
    %c0_26 = arith.constant 0 : index
    %c0_27 = arith.constant 0 : index
    %20 = vector.load %arg4[%c0_26, %c0_27] : memref<264x128xf32, #tpu.memory_space<vmem>>, vector<128x128xf32>
    %cst_28 = arith.constant dense<0.000000e+00> : vector<16x128xf32>
    %21 = tpu.matmul %19, %20, %cst_28 {dimension_numbers = #tpu.dot_dimension_numbers<[1], [0], [0], [1], [0, 0, 1, 1], [], []>} : vector<16x128xf32>, vector<128x128xf32>, vector<16x128xf32> -> vector<16x128xf32>
    %22 = arith.negf %21 : vector<16x128xf32>
    %23 = math.exp %22 : vector<16x128xf32>
    %cst_29 = arith.constant 1.000000e+00 : f32
    %24 = vector.broadcast %cst_29 : f32 to vector<16x128xf32>
    %25 = arith.addf %24, %23 : vector<16x128xf32>
    %26 = arith.divf %24, %25 : vector<16x128xf32>
    %27 = arith.mulf %21, %26 : vector<16x128xf32>
    %28 = vector.extract_strided_slice %27 {offsets = [0, 0], sizes = [8, 128], strides = [1, 1]} : vector<16x128xf32> to vector<8x128xf32>
    %29 = vector.extract_strided_slice %27 {offsets = [8, 0], sizes = [8, 128], strides = [1, 1]} : vector<16x128xf32> to vector<8x128xf32>
    %30 = arith.subf %29, %28 : vector<8x128xf32>
    %cst_30 = arith.constant 2.000000e+00 : f32
    %31 = vector.broadcast %cst_30 : f32 to vector<8x128xf32>
    %32 = arith.mulf %31, %30 : vector<8x128xf32>
    %33 = arith.addf %28, %32 : vector<8x128xf32>
    %c128 = arith.constant 128 : index
    %c0_31 = arith.constant 0 : index
    %34 = vector.load %arg4[%c128, %c0_31] : memref<264x128xf32, #tpu.memory_space<vmem>>, vector<128x128xf32>
    %cst_32 = arith.constant dense<0.000000e+00> : vector<8x128xf32>
    %35 = tpu.matmul %33, %34, %cst_32 {dimension_numbers = #tpu.dot_dimension_numbers<[1], [0], [0], [1], [0, 0, 1, 1], [], []>} : vector<8x128xf32>, vector<128x128xf32>, vector<8x128xf32> -> vector<8x128xf32>
    %c256 = arith.constant 256 : index
    %c0_33 = arith.constant 0 : index
    %36 = vector.load %arg4[%c256, %c0_33] : memref<264x128xf32, #tpu.memory_space<vmem>>, vector<1x128xf32>
    %37 = vector.broadcast %36 : vector<1x128xf32> to vector<8x128xf32>
    %38 = arith.addf %35, %37 : vector<8x128xf32>
    %c0_34 = arith.constant 0 : index
    %c0_35 = arith.constant 0 : index
    %39 = vector.load %arg5[%c0_34, %c0_35] : memref<8x128xf32, #tpu.memory_space<vmem>>, vector<8x128xf32>
    tpu.vector_store %arg5[%c0_34, %c0_35], %38 {strides = array<i32>} : memref<8x128xf32, #tpu.memory_space<vmem>>, vector<8x128xf32>,
    return
  }
}

</mosaic_0001>

<llo_original>
// kernel: _fwd.1
$region0: #{_fwd.1}
  #allocation0 [shape = 'u32[]', space=smem, size = 0x4, offset = 0x4, fixed_abs, tag = 'smem constant byte address 0x4 - core index']
  #allocation1 [shape = 'u32[144,128]{1,0:T(1,128)}', space=vmem, size = 0x12000, scoped, tag = 'internal scratch']
  #allocation2 [shape = 'f32[16,128]{1,0:T(8,128)}', space=vmem, size = 0x2000, scoped, tag = 'scratch operand']
  %s0 = inlined_call_operand.vmem [shape: f32[8,16], index: 0, kind: input, shape index: {}]
  %s1 = inlined_call_operand.hbm [shape: f32[8,16], index: 1, kind: input, shape index: {}]
  %s2 = inlined_call_operand.vmem [shape: f32[8,16], index: 2, kind: input, shape index: {}]
  %s3 = inlined_call_operand.vmem [shape: f32[8,1], index: 3, kind: input, shape index: {}]
  %s4 = inlined_call_operand.hbm [shape: f32[264,128], index: 4, kind: input, shape index: {}]
  %s5 = inlined_call_operand.hbm [shape: f32[8,128], index: 5, kind: output, shape index: {}]
  %s6 = sld [smem:[#allocation0]]
  $region38: #{_fwd.1} parent=0
    _
  %s8 = ssub.s32 1, %s6
  %s9 = scalar_select 0, %s8, %s6
  $region1: #{_fwd.1} parent=0
    #allocation3 [shape = 'u8[4096]{0}', space=vmem, size = 0x1000, scoped, tag = 'input window, operand 1, single buffered']
    #allocation4 [shape = 's32[1]{0}', space=sflag, size = 0x4, scoped, tag = 'scoped memory for _fwd.1']
    #allocation5 [shape = 's32[1]{0}', space=sflag, size = 0x4, scoped, tag = 'scoped memory for _fwd.1']
    #allocation6 [shape = 'u8[135168]{0}', space=vmem, size = 0x21000, scoped, tag = 'input window, operand 4, single buffered']
    #allocation7 [shape = 's32[1]{0}', space=sflag, size = 0x4, scoped, tag = 'scoped memory for _fwd.1']
    #allocation8 [shape = 'u8[4096]{0}', space=vmem, size = 0x1000, scoped, tag = 'output window, operand 0, single buffered']
    %10 = vsyncpa [#allocation4], 0
    %11 = vsyncpa [#allocation7], 0
    %12 = vsyncpa [#allocation5], 0
    // Predicated region
    $region2: #{_fwd.1} parent=1 // pred_check
      _
    $region3: #{_fwd.1} parent=1 // pred_check_branch
      %14 = sbr.rel (0) target = $region5
    $region4: #{_fwd.1} parent=1 // pred_region
      _
    $region5: #{_fwd.1} parent=1 // pred_fallthru
      _
    // Predicated region
    $region6: #{_fwd.1} parent=1 // pred_check
      _
    $region7: #{_fwd.1} parent=1 // pred_check_branch
      %16 = sbr.rel (0) target = $region9
    $region8: #{_fwd.1} parent=1 // pred_region
      %s18 = ssub.s32 128, 128
      %19 = vsyncadd [#allocation4], %s18
      %s21 = sshll.u32 [#allocation3], 4
      %s22 = int_to_ptr.vmem [resolvable:$true] %s21
      %24 = dma.hbm_to_vmem [thread:$0]  %s1, 128, %s22, [#allocation4]
    $region9: #{_fwd.1} parent=1 // pred_fallthru
      _
    // Predicated region
    $region10: #{_fwd.1} parent=1 // pred_check
      _
    $region11: #{_fwd.1} parent=1 // pred_check_branch
      %26 = sbr.rel (0) target = $region13
    $region12: #{_fwd.1} parent=1 // pred_region
      _
    $region13: #{_fwd.1} parent=1 // pred_fallthru
      _
    // Predicated region
    $region14: #{_fwd.1} parent=1 // pred_check
      _
    $region15: #{_fwd.1} parent=1 // pred_check_branch
      %28 = sbr.rel (0) target = $region17
    $region16: #{_fwd.1} parent=1 // pred_region
      _
    $region17: #{_fwd.1} parent=1 // pred_fallthru
      _
    // Predicated region
    $region18: #{_fwd.1} parent=1 // pred_check
      _
    $region19: #{_fwd.1} parent=1 // pred_check_branch
      %30 = sbr.rel (0) target = $region21
    $region20: #{_fwd.1} parent=1 // pred_region
      %s32 = ssub.s32 4224, 4224
      %33 = vsyncadd [#allocation7], %s32
      %s34 = sshll.u32 [#allocation6], 4
      %s35 = int_to_ptr.vmem [resolvable:$true] %s34
      %40 = dma.hbm_to_vmem [thread:$0]  %s4, 4224, %s35, [#allocation7], 128, 128, 8
    $region21: #{_fwd.1} parent=1 // pred_fallthru
      _
    // Predicated region
    $region22: #{_fwd.1} parent=1 // pred_check
      _
    $region23: #{_fwd.1} parent=1 // pred_check_branch
      %42 = sbr.rel (0) target = $region25
    $region24: #{_fwd.1} parent=1 // pred_region
      %43 = dma.done [#allocation4], 128
    $region25: #{_fwd.1} parent=1 // pred_fallthru
      _
    // Predicated region
    $region26: #{_fwd.1} parent=1 // pred_check
      _
    $region27: #{_fwd.1} parent=1 // pred_check_branch
      %45 = sbr.rel (0) target = $region29
    $region28: #{_fwd.1} parent=1 // pred_region
      %46 = dma.done [#allocation7], 4224
    $region29: #{_fwd.1} parent=1 // pred_fallthru
      _
    %v47 = vld [vmem:[%s3] sm:$0xff]
    %v48 = vlog2.pop %v47
    %v49 = vmul.f32 %v48, 0.6931472
    %v50 = vmul.f32 %v49, 0.25
    %v51 = vld [vmem:[%s0] sm:$0xff]
    %v52 = vld [vmem:[#allocation3] sm:$0xff]
    %53 = vst [vmem:[#allocation2] sm:$0xff] 0.0
    %54 = vst [vmem:[#allocation2 + $0x8] sm:$0xff] 0.0
    %vm55 = vcmask 130048
    %56 = vst.msk [vmem:[#allocation2] sm:$0xff] %vm55, %v51
    %58 = vrot.lane.b32.xlu0 %v52, 16
    %v59 = vpop.permute.xlu0 %58
    %vm61 = vcmask 261248
    %62 = vst.msk [vmem:[#allocation2] sm:$0xff] %vm61, %v59
    %64 = vrot.lane.b32.xlu0 %v50, 48
    %v65 = vpop.permute.xlu0 %64
    %vm67 = vcmask 400768
    %68 = vst.msk [vmem:[#allocation2] sm:$0xff] %vm67, %v65
    %vm69 = vcmask 408968
    %70 = vst.msk [vmem:[#allocation2] sm:$0xff] %vm69, 1.0
    %v71 = vld [vmem:[%s2] sm:$0xff]
    %72 = vst.msk [vmem:[#allocation2 + $0x8] sm:$0xff] %vm55, %v51
    %73 = vst.msk [vmem:[#allocation2 + $0x8] sm:$0xff] %vm61, %v59
    %75 = vrot.lane.b32.xlu0 %v71, 32
    %v76 = vpop.permute.xlu0 %75
    %vm78 = vcmask 392448
    %79 = vst.msk [vmem:[#allocation2 + $0x8] sm:$0xff] %vm78, %v76
    %80 = vst.msk [vmem:[#allocation2 + $0x8] sm:$0xff] %vm67, %v65
    %81 = vst.msk [vmem:[#allocation2 + $0x8] sm:$0xff] %vm69, 1.0
    %v82 = vld [vmem:[#allocation2] sm:$0xff]
    %v83 = vld [vmem:[#allocation2 + $0x8] sm:$0xff]
    %v84 = vld [vmem:[#allocation6] sm:$0xff]
    %v85 = vld [vmem:[#allocation6 + $0x8] sm:$0xff]
    %v86 = vld [vmem:[#allocation6 + $0x10] sm:$0xff]
    %v87 = vld [vmem:[#allocation6 + $0x18] sm:$0xff]
    %v88 = vld [vmem:[#allocation6 + $0x20] sm:$0xff]
    %v89 = vld [vmem:[#allocation6 + $0x28] sm:$0xff]
    %v90 = vld [vmem:[#allocation6 + $0x30] sm:$0xff]
    %v91 = vld [vmem:[#allocation6 + $0x38] sm:$0xff]
    %v92 = vld [vmem:[#allocation6 + $0x40] sm:$0xff]
    %v93 = vld [vmem:[#allocation6 + $0x48] sm:$0xff]
    %v94 = vld [vmem:[#allocation6 + $0x50] sm:$0xff]
    %v95 = vld [vmem:[#allocation6 + $0x58] sm:$0xff]
    %v96 = vld [vmem:[#allocation6 + $0x60] sm:$0xff]
    %v97 = vld [vmem:[#allocation6 + $0x68] sm:$0xff]
    %v98 = vld [vmem:[#allocation6 + $0x70] sm:$0xff]
    %v99 = vld [vmem:[#allocation6 + $0x78] sm:$0xff]
    %100 = vmatprep.subr.mxu0 0.0
    %101 = vmatpush1.msra.mxu0 %v84
    %102 = vmatprep.subr.mxu0 0.0
    %103 = vmatpush1.msra.mxu0 %v85
    %104 = vmatprep.subr.mxu0 0.0
    %105 = vmatpush1.msra.mxu0 %v86
    %106 = vmatprep.subr.mxu0 0.0
    %107 = vmatpush1.msra.mxu0 %v87
    %108 = vmatprep.subr.mxu0 0.0
    %109 = vmatpush1.msra.mxu0 %v88
    %110 = vmatprep.subr.mxu0 0.0
    %111 = vmatpush1.msra.mxu0 %v89
    %112 = vmatprep.subr.mxu0 0.0
    %113 = vmatpush1.msra.mxu0 %v90
    %114 = vmatprep.subr.mxu0 0.0
    %115 = vmatpush1.msra.mxu0 %v91
    %116 = vmatprep.subr.mxu0 0.0
    %117 = vmatpush1.msra.mxu0 %v92
    %118 = vmatprep.subr.mxu0 0.0
    %119 = vmatpush1.msra.mxu0 %v93
    %120 = vmatprep.subr.mxu0 0.0
    %121 = vmatpush1.msra.mxu0 %v94
    %122 = vmatprep.subr.mxu0 0.0
    %123 = vmatpush1.msra.mxu0 %v95
    %124 = vmatprep.subr.mxu0 0.0
    %125 = vmatpush1.msra.mxu0 %v96
    %126 = vmatprep.subr.mxu0 0.0
    %127 = vmatpush1.msra.mxu0 %v97
    %128 = vmatprep.subr.mxu0 0.0
    %129 = vmatpush1.msra.mxu0 %v98
    %130 = vmatprep.subr.mxu0 0.0
    %131 = vmatpush1.msra.mxu0 %v99
    %132 = vmatprep.subr.mxu0 0.0
    %133 = vmatpush1.msra.mxu0 0.0
    %134 = vmatprep.subr.mxu0 0.0
    %135 = vmatpush1.msra.mxu0 0.0
    %136 = vmatprep.subr.mxu0 0.0
    %137 = vmatpush1.msra.mxu0 0.0
    %138 = vmatprep.subr.mxu0 0.0
    %139 = vmatpush1.msra.mxu0 0.0
    %140 = vmatprep.subr.mxu0 0.0
    %141 = vmatpush1.msra.mxu0 0.0
    %142 = vmatprep.subr.mxu0 0.0
    %143 = vmatpush1.msra.mxu0 0.0
    %144 = vmatprep.subr.mxu0 0.0
    %145 = vmatpush1.msra.mxu0 0.0
    %146 = vmatprep.subr.mxu0 0.0
    %147 = vmatpush1.msra.mxu0 0.0
    %148 = vmatprep.subr.mxu0 0.0
    %149 = vmatpush1.msra.mxu0 0.0
    %150 = vmatprep.subr.mxu0 0.0
    %151 = vmatpush1.msra.mxu0 0.0
    %152 = vmatprep.subr.mxu0 0.0
    %153 = vmatpush1.msra.mxu0 0.0
    %154 = vmatprep.subr.mxu0 0.0
    %155 = vmatpush1.msra.mxu0 0.0
    %156 = vmatprep.subr.mxu0 0.0
    %157 = vmatpush1.msra.mxu0 0.0
    %158 = vmatprep.subr.mxu0 0.0
    %159 = vmatpush1.msra.mxu0 0.0
    %160 = vmatprep.subr.mxu0 0.0
    %161 = vmatpush1.msra.mxu0 0.0
    %162 = vmatprep.subr.mxu0 0.0
    %163 = vmatpush1.msra.mxu0 0.0
    %164 = vmatprep.mubr.f32.mxu0 0.0
    %165 = vmatmul.mubr.f32.gmra.mrb[0].mxu0 %v82
    %v166 = vpop.f32.mrb[0].mxu0
    %v167 = vadd.f32 0.0, %v166
    %v168 = vpop.f32.mrb[0].mxu0
    %169 = vmatprep.mubr.f32.mxu0 0.0
    %170 = vmatmul.mubr.f32.gmra.mrb[0].mxu0 %v83
    %v171 = vpop.f32.mrb[0].mxu0
    %v172 = vadd.f32 0.0, %v171
    %v173 = vpop.f32.mrb[0].mxu0
    %174 = vdwg.mxu0
    %v175 = vxor.u32 %v167, 2147483648
    %v176 = vxor.u32 %v172, 2147483648
    %v177 = vmul.f32 %v175, 1.442695
    %v178 = vpow.pop %v177
    %v179 = vmul.f32 %v176, 1.442695
    %v180 = vpow.pop %v179
    %v181 = vadd.f32 %v178, 1.0
    %v182 = vadd.f32 %v180, 1.0
    %v183 = vrcp.pop %v181
    %v184 = vmul.f32 1.0, %v183
    %v185 = vrcp.pop %v182
    %v186 = vmul.f32 1.0, %v185
    %v187 = vmul.f32 %v167, %v184
    %v188 = vmul.f32 %v172, %v186
    %v189 = vsub.f32 %v188, %v187
    %v190 = vmul.f32 %v189, 2.0
    %v191 = vadd.f32 %v187, %v190
    %v192 = vld [vmem:[#allocation6 + $0x80] sm:$0xff]
    %v193 = vld [vmem:[#allocation6 + $0x88] sm:$0xff]
    %v194 = vld [vmem:[#allocation6 + $0x90] sm:$0xff]
    %v195 = vld [vmem:[#allocation6 + $0x98] sm:$0xff]
    %v196 = vld [vmem:[#allocation6 + $0xa0] sm:$0xff]
    %v197 = vld [vmem:[#allocation6 + $0xa8] sm:$0xff]
    %v198 = vld [vmem:[#allocation6 + $0xb0] sm:$0xff]
    %v199 = vld [vmem:[#allocation6 + $0xb8] sm:$0xff]
    %v200 = vld [vmem:[#allocation6 + $0xc0] sm:$0xff]
    %v201 = vld [vmem:[#allocation6 + $0xc8] sm:$0xff]
    %v202 = vld [vmem:[#allocation6 + $0xd0] sm:$0xff]
    %v203 = vld [vmem:[#allocation6 + $0xd8] sm:$0xff]
    %v204 = vld [vmem:[#allocation6 + $0xe0] sm:$0xff]
    %v205 = vld [vmem:[#allocation6 + $0xe8] sm:$0xff]
    %v206 = vld [vmem:[#allocation6 + $0xf0] sm:$0xff]
    %v207 = vld [vmem:[#allocation6 + $0xf8] sm:$0xff]
    %v208 = vld [vmem:[#allocation6 + $0x100] sm:$0x1]
    %v209 = vlaneseq
    %v210 = vshrl.u32 %v209, 7
    %v211 = vsub.s32 0, %v210
    %v212 = vrot.slane %v208, %v211
    %213 = vmatprep.subr.mxu0 0.0
    %214 = vmatpush1.msra.mxu0 %v192
    %215 = vmatprep.subr.mxu0 0.0
    %216 = vmatpush1.msra.mxu0 %v193
    %217 = vmatprep.subr.mxu0 0.0
    %218 = vmatpush1.msra.mxu0 %v194
    %219 = vmatprep.subr.mxu0 0.0
    %220 = vmatpush1.msra.mxu0 %v195
    %221 = vmatprep.subr.mxu0 0.0
    %222 = vmatpush1.msra.mxu0 %v196
    %223 = vmatprep.subr.mxu0 0.0
    %224 = vmatpush1.msra.mxu0 %v197
    %225 = vmatprep.subr.mxu0 0.0
    %226 = vmatpush1.msra.mxu0 %v198
    %227 = vmatprep.subr.mxu0 0.0
    %228 = vmatpush1.msra.mxu0 %v199
    %229 = vmatprep.subr.mxu0 0.0
    %230 = vmatpush1.msra.mxu0 %v200
    %231 = vmatprep.subr.mxu0 0.0
    %232 = vmatpush1.msra.mxu0 %v201
    %233 = vmatprep.subr.mxu0 0.0
    %234 = vmatpush1.msra.mxu0 %v202
    %235 = vmatprep.subr.mxu0 0.0
    %236 = vmatpush1.msra.mxu0 %v203
    %237 = vmatprep.subr.mxu0 0.0
    %238 = vmatpush1.msra.mxu0 %v204
    %239 = vmatprep.subr.mxu0 0.0
    %240 = vmatpush1.msra.mxu0 %v205
    %241 = vmatprep.subr.mxu0 0.0
    %242 = vmatpush1.msra.mxu0 %v206
    %243 = vmatprep.subr.mxu0 0.0
    %244 = vmatpush1.msra.mxu0 %v207
    %245 = vmatprep.subr.mxu0 0.0
    %246 = vmatpush1.msra.mxu0 0.0
    %247 = vmatprep.subr.mxu0 0.0
    %248 = vmatpush1.msra.mxu0 0.0
    %249 = vmatprep.subr.mxu0 0.0
    %250 = vmatpush1.msra.mxu0 0.0
    %251 = vmatprep.subr.mxu0 0.0
    %252 = vmatpush1.msra.mxu0 0.0
    %253 = vmatprep.subr.mxu0 0.0
    %254 = vmatpush1.msra.mxu0 0.0
    %255 = vmatprep.subr.mxu0 0.0
    %256 = vmatpush1.msra.mxu0 0.0
    %257 = vmatprep.subr.mxu0 0.0
    %258 = vmatpush1.msra.mxu0 0.0
    %259 = vmatprep.subr.mxu0 0.0
    %260 = vmatpush1.msra.mxu0 0.0
    %261 = vmatprep.subr.mxu0 0.0
    %262 = vmatpush1.msra.mxu0 0.0
    %263 = vmatprep.subr.mxu0 0.0
    %264 = vmatpush1.msra.mxu0 0.0
    %265 = vmatprep.subr.mxu0 0.0
    %266 = vmatpush1.msra.mxu0 0.0
    %267 = vmatprep.subr.mxu0 0.0
    %268 = vmatpush1.msra.mxu0 0.0
    %269 = vmatprep.subr.mxu0 0.0
    %270 = vmatpush1.msra.mxu0 0.0
    %271 = vmatprep.subr.mxu0 0.0
    %272 = vmatpush1.msra.mxu0 0.0
    %273 = vmatprep.subr.mxu0 0.0
    %274 = vmatpush1.msra.mxu0 0.0
    %275 = vmatprep.subr.mxu0 0.0
    %276 = vmatpush1.msra.mxu0 0.0
    %277 = vmatprep.mubr.f32.mxu0 0.0
    %278 = vmatmul.mubr.f32.gmra.mrb[0].mxu0 %v191
    %v279 = vpop.f32.mrb[0].mxu0
    %v280 = vadd.f32 %v212, %v279
    %v281 = vpop.f32.mrb[0].mxu0
    %282 = vdwg.mxu0
    %283 = vst [vmem:[#allocation8] sm:$0xff] %v280
    // Predicated region
    $region30: #{_fwd.1} parent=1 // pred_check
      _
    $region31: #{_fwd.1} parent=1 // pred_check_branch
      %285 = sbr.rel (0) target = $region33
    $region32: #{_fwd.1} parent=1 // pred_region
      %s287 = ssub.s32 128, 128
      %288 = vsyncadd [#allocation5], %s287
      %s290 = sshll.u32 [#allocation8], 4
      %s291 = int_to_ptr.vmem [resolvable:$true] %s290
      %293 = dma.vmem_to_hbm [thread:$0]  %s291, 128, %s5, [#allocation5]
    $region33: #{_fwd.1} parent=1 // pred_fallthru
      _
    // Predicated region
    $region34: #{_fwd.1} parent=1 // pred_check
      _
    $region35: #{_fwd.1} parent=1 // pred_check_branch
      %295 = sbr.rel (0) target = $region37
    $region36: #{_fwd.1} parent=1 // pred_region
      %296 = dma.done [#allocation5], 128
    $region37: #{_fwd.1} parent=1 // pred_fallthru
      _
    %297 = vsyncpa [#allocation4], 1
    %298 = vsyncpa [#allocation7], 1
    %299 = vsyncpa [#allocation5], 1

</llo_original>
